<compile_context>
chip_gen: v6e
topology: v6e:2x2x1
jax: 0.10.0
libtpu: 0.0.40
codegen_flags: <defaults>
</compile_context>

<pallas_src>
import jax
import jax.numpy as jnp
from jax.experimental import pallas as pl
from jax.experimental.pallas import tpu as pltpu

THRESHOLD = 1.0
LANE = 1024       # lane-dense last dim (multiple of 128)
TILE_R = 512      # rows per block -> (512, 1024) f32 = 2 MiB tile


def _if_neurons_kernel(x_ref, v_ref, y_ref, vout_ref):
    # Elementwise hot path: integrate, spike (heaviside), reset-to-zero.
    v1 = x_ref[...] + v_ref[...]
    spike = v1 >= THRESHOLD
    y_ref[...] = spike.astype(v1.dtype)
    vout_ref[...] = jnp.where(spike, jnp.zeros_like(v1), v1)


def _padded_layout(total):
    """Return (rows, tile_r, padded_total) for a lane-dense (rows, LANE) slab."""
    lane = LANE if total >= LANE else 128
    rows = -(-total // lane)
    if rows >= TILE_R:
        tile_r = TILE_R
        rows = -(-rows // tile_r) * tile_r      # pad rows to multiple of TILE_R
    else:
        tile_r = rows                            # block == full dim (always legal)
    return rows, tile_r, lane


@jax.jit
def if_neurons_forward(x, v):
    """One IF_Neurons step.

    Args:
      x: (N, C, H, W) float32 input current.
      v: (N, C, H, W) float32 membrane potential state (zeros after reset).
    Returns:
      (y, v_new): spikes and updated membrane potential, both (N, C, H, W).
    """
    orig_shape = x.shape
    dtype = x.dtype
    total = x.size

    rows, tile_r, lane = _padded_layout(total)
    padded_total = rows * lane
    pad = padded_total - total

    xf = x.reshape(-1)
    vf = v.reshape(-1)
    if pad:
        # Zero padding: v1 = 0 < threshold -> no spike; padded region is dropped.
        xf = jnp.pad(xf, (0, pad))
        vf = jnp.pad(vf, (0, pad))
    x2 = xf.reshape(rows, lane)
    v2 = vf.reshape(rows, lane)

    spec = pl.BlockSpec((tile_r, lane), lambda i: (i, 0))
    out_shape = jax.ShapeDtypeStruct((rows, lane), dtype)

    y2, v2_new = pl.pallas_call(
        _if_neurons_kernel,
        out_shape=(out_shape, out_shape),
        grid_spec=pltpu.PrefetchScalarGridSpec(
            num_scalar_prefetch=0,
            grid=(rows // tile_r,),
            in_specs=[spec, spec],
            out_specs=(spec, spec),
        ),
        # v_new reuses v's HBM buffer (inputs: 0=x, 1=v; outputs: 0=y, 1=v_new).
        input_output_aliases={1: 1},
        compiler_params=pltpu.CompilerParams(
            dimension_semantics=("parallel",),
            vmem_limit_bytes=32 * 1024 * 1024,
        ),
    )(x2, v2)

    y = y2.reshape(-1)[:total].reshape(orig_shape)
    v_new = v2_new.reshape(-1)[:total].reshape(orig_shape)
    return y, v_new


class IFNeurons:
    """Thin stateful wrapper mirroring the PyTorch module interface."""

    def __init__(self):
        self.threshold = THRESHOLD
        self.v = None  # lazily materialized to input shape (PyTorch init: scalar 0.0)

    def reset(self):
        self.v = None

    def __call__(self, x):
        if self.v is None:
            self.v = jnp.zeros_like(x)
        y, self.v = if_neurons_forward(x, self.v)
        return y


if __name__ == "__main__":
    key = jax.random.PRNGKey(0)
    # Small NCHW input consistent with a spiking conv feature map.
    x_shape = (2, 4, 16, 16)
    k1, k2 = jax.random.split(key)
    x1 = jax.random.normal(k1, x_shape, dtype=jnp.float32) * 1.5
    x2 = jax.random.normal(k2, x_shape, dtype=jnp.float32) * 1.5

    neurons = IFNeurons()
    y1 = neurons(x1)          # first step: v starts at 0
    y2 = neurons(x2)          # second step: uses carried membrane state
    jax.block_until_ready((y1, y2, neurons.v))

    # Reference check in plain JAX (same math, no Pallas).
    v_ref = jnp.zeros(x_shape, jnp.float32)
    v1_ref = x1 + v_ref
    y1_ref = (v1_ref - THRESHOLD >= 0).astype(jnp.float32)
    v_ref = v1_ref * (1.0 - y1_ref)
    v2_ref = x2 + v_ref
    y2_ref = (v2_ref - THRESHOLD >= 0).astype(jnp.float32)
    v_ref = v2_ref * (1.0 - y2_ref)

    assert jnp.array_equal(y1, y1_ref)
    assert jnp.array_equal(y2, y2_ref)
    assert jnp.allclose(neurons.v, v_ref)

    # Larger, ragged shape to exercise the tiled/padded path (multiple grid steps).
    big_shape = (4, 32, 67, 93)
    xb = jax.random.normal(jax.random.PRNGKey(1), big_shape, dtype=jnp.float32) * 1.5
    vb = jax.random.normal(jax.random.PRNGKey(2), big_shape, dtype=jnp.float32)
    yb, vb_new = if_neurons_forward(xb, vb)
    jax.block_until_ready((yb, vb_new))
    v1b = xb + vb
    yb_ref = (v1b >= THRESHOLD).astype(jnp.float32)
    vb_ref = v1b * (1.0 - yb_ref)
    assert jnp.array_equal(yb, yb_ref)
    assert jnp.allclose(vb_new, vb_ref)

    print("KERNEL_OK")
</pallas_src>

<mosaic_0001>
module attributes {stable_mosaic.version = 11 : i64} {
  func.func @_if_neurons_kernel(%arg0: i32, %arg1: memref<2x1024xf32, #tpu.memory_space<vmem>>, %arg2: memref<2x1024xf32, #tpu.memory_space<vmem>>, %arg3: memref<2x1024xf32, #tpu.memory_space<vmem>>, %arg4: memref<2x1024xf32, #tpu.memory_space<vmem>>) attributes {dimension_semantics = [#tpu.dimension_semantics<parallel>], iteration_bounds = array<i64: 1>, scalar_prefetch = 0 : i64, scratch_operands = 0 : i64, tpu.core_type = #tpu.core_type<tc>, window_params = [{transform_indices = @transform_0, window_bounds = array<i64: 2, 1024>}, {transform_indices = @transform_1, window_bounds = array<i64: 2, 1024>}, {transform_indices = @transform_2, window_bounds = array<i64: 2, 1024>}, {transform_indices = @transform_3, window_bounds = array<i64: 2, 1024>}]} {
    %c0 = arith.constant 0 : index
    %c0_0 = arith.constant 0 : index
    %0 = vector.load %arg1[%c0, %c0_0] : memref<2x1024xf32, #tpu.memory_space<vmem>>, vector<2x1024xf32>
    %c0_1 = arith.constant 0 : index
    %c0_2 = arith.constant 0 : index
    %1 = vector.load %arg2[%c0_1, %c0_2] : memref<2x1024xf32, #tpu.memory_space<vmem>>, vector<2x1024xf32>
    %2 = arith.addf %0, %1 : vector<2x1024xf32>
    %cst = arith.constant 1.000000e+00 : f32
    %3 = vector.broadcast %cst : f32 to vector<2x1024xf32>
    %4 = arith.cmpf oge, %2, %3 : vector<2x1024xf32>
    %5 = arith.extui %4 : vector<2x1024xi1> to vector<2x1024xi32>
    %6 = arith.sitofp %5 : vector<2x1024xi32> to vector<2x1024xf32>
    %c0_3 = arith.constant 0 : index
    %c0_4 = arith.constant 0 : index
    %7 = vector.load %arg3[%c0_3, %c0_4] : memref<2x1024xf32, #tpu.memory_space<vmem>>, vector<2x1024xf32>
    tpu.vector_store %arg3[%c0_3, %c0_4], %6 {strides = array<i32>} : memref<2x1024xf32, #tpu.memory_space<vmem>>, vector<2x1024xf32>,
    %cst_5 = arith.constant 0.000000e+00 : f32
    %8 = vector.broadcast %cst_5 : f32 to vector<2x1024xf32>
    %9 = arith.select %4, %8, %2 : vector<2x1024xi1>, vector<2x1024xf32>
    %c0_6 = arith.constant 0 : index
    %c0_7 = arith.constant 0 : index
    %10 = vector.load %arg4[%c0_6, %c0_7] : memref<2x1024xf32, #tpu.memory_space<vmem>>, vector<2x1024xf32>
    tpu.vector_store %arg4[%c0_6, %c0_7], %9 {strides = array<i32>} : memref<2x1024xf32, #tpu.memory_space<vmem>>, vector<2x1024xf32>,
    return
  }
  func.func @transform_0(%arg0: i32) -> (i32, i32) {
    %c0_i32 = arith.constant 0 : i32
    %c0_i32_0 = arith.constant 0 : i32
    return %arg0, %c0_i32 : i32, i32
  }
  func.func @transform_1(%arg0: i32) -> (i32, i32) {
    %c0_i32 = arith.constant 0 : i32
    %c0_i32_0 = arith.constant 0 : i32
    return %arg0, %c0_i32 : i32, i32
  }
  func.func @transform_2(%arg0: i32) -> (i32, i32) {
    %c0_i32 = arith.constant 0 : i32
    %c0_i32_0 = arith.constant 0 : i32
    return %arg0, %c0_i32 : i32, i32
  }
  func.func @transform_3(%arg0: i32) -> (i32, i32) {
    %c0_i32 = arith.constant 0 : i32
    %c0_i32_0 = arith.constant 0 : i32
    return %arg0, %c0_i32 : i32, i32
  }
}

</mosaic_0001>

<llo_original>
// kernel: if_neurons_forward.1
$region0: #{if_neurons_forward.1}
  #allocation0 [shape = 'u32[]', space=smem, size = 0x4, offset = 0x4, fixed_abs, tag = 'smem constant byte address 0x4 - core index']
  #allocation1 [shape = 'u32[144,128]{1,0:T(1,128)}', space=vmem, size = 0x12000, scoped, tag = 'internal scratch']
  %s0 = inlined_call_operand.vmem [shape: f32[2,1024], index: 0, kind: input, shape index: {}]
  %s1 = inlined_call_operand.vmem [shape: f32[2,1024], index: 1, kind: input, shape index: {}, may-alias: {1,3}]
  %s2 = inlined_call_operand.vmem [shape: f32[2,1024], index: 2, kind: output, shape index: {0}]
  %s3 = inlined_call_operand.vmem [shape: f32[2,1024], index: 3, kind: output, shape index: {1}, may-alias: {1,3}]
  %4 = xla_tuple %s2, %s3
  %s5 = sld [smem:[#allocation0]]
  $region26: #{if_neurons_forward.1} parent=0
    _
  %s7 = ssub.s32 1, %s5
  %s8 = scalar_select 0, %s7, %s5
  // Predicated region
  $region2: #{if_neurons_forward.1} parent=0 // pred_check
    _
  $region3: #{if_neurons_forward.1} parent=0 // pred_check_branch
    %10 = sbr.rel (0) target = $region5
  $region4: #{if_neurons_forward.1} parent=0 // pred_region
    _
  $region5: #{if_neurons_forward.1} parent=0 // pred_fallthru
    _
  // Predicated region
  $region6: #{if_neurons_forward.1} parent=0 // pred_check
    _
  $region7: #{if_neurons_forward.1} parent=0 // pred_check_branch
    %12 = sbr.rel (0) target = $region9
  $region8: #{if_neurons_forward.1} parent=0 // pred_region
    _
  $region9: #{if_neurons_forward.1} parent=0 // pred_fallthru
    _
  %v13 = vld [vmem:[%s0] sm:$0xff]
  %v14 = vld [vmem:[%s0 + $0x8] sm:$0xff]
  %v15 = vld [vmem:[%s1] sm:$0xff]
  %v16 = vld [vmem:[%s1 + $0x8] sm:$0xff]
  %v17 = vadd.f32 %v13, %v15
  %v18 = vadd.f32 %v14, %v16
  %vm19 = vcmp.ge.f32.partialorder %v17, 1.0
  %vm20 = vcmp.ge.f32.partialorder %v18, 1.0
  %v21 = vsel %vm19, 1, 0
  %v22 = vsel %vm20, 1, 0
  %v23 = vcvt.s32.f32 %v21
  %v24 = vcvt.s32.f32 %v22
  %25 = vst [vmem:[%s2] sm:$0xff] %v23
  %26 = vst [vmem:[%s2 + $0x8] sm:$0xff] %v24
  %v27 = vsel %vm19, 0.0, %v17
  %v28 = vsel %vm20, 0.0, %v18
  %29 = vst [vmem:[%s3] sm:$0xff] %v27
  %30 = vst [vmem:[%s3 + $0x8] sm:$0xff] %v28
  // Predicated region
  $region10: #{if_neurons_forward.1} parent=0 // pred_check
    _
  $region11: #{if_neurons_forward.1} parent=0 // pred_check_branch
    %32 = sbr.rel (0) target = $region13
  $region12: #{if_neurons_forward.1} parent=0 // pred_region
    _
  $region13: #{if_neurons_forward.1} parent=0 // pred_fallthru
    _
  // Predicated region
  $region14: #{if_neurons_forward.1} parent=0 // pred_check
    _
  $region15: #{if_neurons_forward.1} parent=0 // pred_check_branch
    %34 = sbr.rel (0) target = $region17
  $region16: #{if_neurons_forward.1} parent=0 // pred_region
    _
  $region17: #{if_neurons_forward.1} parent=0 // pred_fallthru
    _
  // Predicated region
  $region18: #{if_neurons_forward.1} parent=0 // pred_check
    _
  $region19: #{if_neurons_forward.1} parent=0 // pred_check_branch
    %36 = sbr.rel (0) target = $region21
  $region20: #{if_neurons_forward.1} parent=0 // pred_region
    _
  $region21: #{if_neurons_forward.1} parent=0 // pred_fallthru
    _
  // Predicated region
  $region22: #{if_neurons_forward.1} parent=0 // pred_check
    _
  $region23: #{if_neurons_forward.1} parent=0 // pred_check_branch
    %38 = sbr.rel (0) target = $region25
  $region24: #{if_neurons_forward.1} parent=0 // pred_region
    _
  $region25: #{if_neurons_forward.1} parent=0 // pred_fallthru
    _

</llo_original>
